<compile_context>
chip_gen: v7x
topology: tpu7x:2x2x1
jax: 0.10.0
libtpu: 0.0.40
codegen_flags: <defaults>
</compile_context>

<pallas_src>
import jax
import jax.numpy as jnp
from jax.experimental import pallas as pl
from jax.experimental.pallas import tpu as pltpu


def _mlp_kernel(x_ref, w1_ref, wrest_ref, b_ref, out_ref):
    """Fused forward: (Linear -> sigmoid) x5 -> Linear (output cols padded to H)."""
    b_all = b_ref[...]                       # (8, H) f32, single vreg-sized load
    h = x_ref[...]                           # (bm, D_in) bf16

    # layer1 -- the only non-trivial matmul (D_in x H), bf16 on the MXU, f32 acc.
    z = jnp.dot(h, w1_ref[...], preferred_element_type=jnp.float32) + b_all[0:1, :]
    h = jax.nn.sigmoid(z)                    # f32; exp lands on the EUP slot

    # layers 2..5 -- (H x H) weights from the packed stack.
    for i in range(4):
        z = (jnp.dot(h.astype(jnp.bfloat16), wrest_ref[i],
                     preferred_element_type=jnp.float32)
             + b_all[i + 1:i + 2, :])
        h = jax.nn.sigmoid(z)

    # output layer (weights/bias pre-padded to H columns; wrapper slices them off).
    z = (jnp.dot(h.astype(jnp.bfloat16), wrest_ref[4],
                 preferred_element_type=jnp.float32)
         + b_all[5:6, :])
    out_ref[...] = z.astype(out_ref.dtype)


def _round_up(n, m):
    return (n + m - 1) // m * m


@jax.jit
def mlp_forward(x, params):
    """x: (B, C, H, W) or (B, D). params: dict name -> (W (in,out), b (1,out))."""
    batch = x.shape[0]
    x_flat = x.reshape(batch, -1)
    d_in = x_flat.shape[1]

    (w1, b1), (w2, b2), (w3, b3), (w4, b4), (w5, b5), (wo, bo) = (
        params["layer1"], params["layer2"], params["layer3"],
        params["layer4"], params["layer5"], params["output"])
    hidden = w1.shape[1]
    out_dims = wo.shape[1]
    assert out_dims <= hidden, "output padding scheme assumes output_dims <= hidden_dims"

    # --- batch tiling -------------------------------------------------------
    # Cap the batch tile at 256 rows; a (256, D_in) bf16 tile is ~0.5 MiB so it
    # fits comfortably even in v7x's 64 MiB VMEM with double buffering.
    bm = 256 if batch >= 256 else _round_up(batch, 8)
    b_pad = _round_up(batch, bm)

    # --- operand packing (plain-JAX glue) ------------------------------------
    x_bf16 = x_flat.astype(jnp.bfloat16)
    if b_pad != batch:
        x_bf16 = jnp.pad(x_bf16, ((0, b_pad - batch), (0, 0)))

    w1_bf16 = w1.astype(jnp.bfloat16)                                   # (D_in, H)
    wo_pad = jnp.pad(wo, ((0, 0), (0, hidden - out_dims)))              # (H, H)
    w_rest = jnp.stack([w2, w3, w4, w5, wo_pad]).astype(jnp.bfloat16)   # (5, H, H)

    def _bias_row(b):
        v = b.reshape(-1).astype(jnp.float32)
        return jnp.pad(v, (0, hidden - v.shape[0]))

    b_pack = jnp.stack(
        [_bias_row(b1), _bias_row(b2), _bias_row(b3), _bias_row(b4),
         _bias_row(b5), _bias_row(bo),
         jnp.zeros((hidden,), jnp.float32), jnp.zeros((hidden,), jnp.float32)])  # (8, H)

    # --- pallas_call ---------------------------------------------------------
    grid = (b_pad // bm,)
    cost = pl.CostEstimate(
        flops=2 * b_pad * (d_in * hidden + 5 * hidden * hidden),
        transcendentals=5 * b_pad * hidden,
        bytes_accessed=(x_bf16.size * 2 + w1_bf16.size * 2 + w_rest.size * 2
                        + b_pack.size * 4 + b_pad * hidden * 4))

    out_pad = pl.pallas_call(
        _mlp_kernel,
        out_shape=jax.ShapeDtypeStruct((b_pad, hidden), jnp.float32),
        grid=grid,
        in_specs=[
            pl.BlockSpec((bm, d_in), lambda i: (i, 0)),            # x: tiled over batch
            pl.BlockSpec((d_in, hidden), lambda i: (0, 0)),        # w1: resident
            pl.BlockSpec((5, hidden, hidden), lambda i: (0, 0, 0)),  # w2..w5 + wo: resident
            pl.BlockSpec((8, hidden), lambda i: (0, 0)),           # biases: resident
        ],
        out_specs=pl.BlockSpec((bm, hidden), lambda i: (i, 0)),
        compiler_params=pltpu.CompilerParams(
            dimension_semantics=("parallel",)),
        cost_estimate=cost,
    )(x_bf16, w1_bf16, w_rest, b_pack)

    return out_pad[:batch, :out_dims]


def init_params(key, input_dims, hidden_dims, output_dims):
    """PyTorch-style init U(-1/sqrt(fan_in), 1/sqrt(fan_in)).

    Weights stored transposed as (in_features, out_features) so the kernel does
    x @ W directly; biases stored as (1, out_features).
    """
    dims = [(input_dims, hidden_dims)] + [(hidden_dims, hidden_dims)] * 4 + \
           [(hidden_dims, output_dims)]
    names = ["layer1", "layer2", "layer3", "layer4", "layer5", "output"]
    params = {}
    for name, (fan_in, fan_out) in zip(names, dims):
        key, kw, kb = jax.random.split(key, 3)
        bound = 1.0 / jnp.sqrt(fan_in)
        w = jax.random.uniform(kw, (fan_in, fan_out), jnp.float32, -bound, bound)
        bias = jax.random.uniform(kb, (1, fan_out), jnp.float32, -bound, bound)
        params[name] = (w, bias)
    return params


def _reference_forward(x, params, matmul_dtype=jnp.float32):
    """Pure-JAX reference. matmul_dtype=bf16 mirrors the kernel's MXU precision."""
    h = x.reshape(x.shape[0], -1).astype(jnp.float32)
    for name in ["layer1", "layer2", "layer3", "layer4", "layer5"]:
        w, bias = params[name]
        z = jnp.dot(h.astype(matmul_dtype), w.astype(matmul_dtype),
                    preferred_element_type=jnp.float32) + bias
        h = jax.nn.sigmoid(z)
    wo, bo = params["output"]
    return jnp.dot(h.astype(matmul_dtype), wo.astype(matmul_dtype),
                   preferred_element_type=jnp.float32) + bo


if __name__ == "__main__":
    key = jax.random.PRNGKey(0)
    k_x, k_p = jax.random.split(key)

    batch, channels, spatial = 8, 4, 16
    input_dims = channels * spatial * spatial   # 1024 after Flatten
    hidden_dims = 32
    output_dims = 8

    x = jax.random.normal(k_x, (batch, channels, spatial, spatial), jnp.float32)
    params = init_params(k_p, input_dims, hidden_dims, output_dims)

    out = mlp_forward(x, params)
    out = jax.block_until_ready(out)
    assert out.shape == (batch, output_dims)

    # Tight check against a precision-matched (bf16 matmul, f32 acc) reference.
    ref_bf16 = _reference_forward(x, params, matmul_dtype=jnp.bfloat16)
    assert jnp.allclose(out, ref_bf16, atol=1e-4, rtol=1e-4)

    # Loose sanity check against the full-f32 PyTorch-equivalent forward.
    ref_f32 = _reference_forward(x, params, matmul_dtype=jnp.float32)
    assert jnp.allclose(out, ref_f32, atol=5e-2, rtol=5e-2)

    print("KERNEL_OK")
</pallas_src>

<mosaic_0001>
module attributes {stable_mosaic.version = 11 : i64} {
  func.func @_mlp_kernel(%arg0: i32, %arg1: memref<8x1024xbf16, #tpu.memory_space<vmem>>, %arg2: memref<1024x32xbf16, #tpu.memory_space<vmem>>, %arg3: memref<5x32x32xbf16, #tpu.memory_space<vmem>>, %arg4: memref<8x32xf32, #tpu.memory_space<vmem>>, %arg5: memref<8x32xf32, #tpu.memory_space<vmem>>) attributes {dimension_semantics = [#tpu.dimension_semantics<parallel>], iteration_bounds = array<i64: 1>, scalar_prefetch = 0 : i64, scratch_operands = 0 : i64, tpu.core_type = #tpu.core_type<tc>, window_params = [{transform_indices = @transform_0, window_bounds = array<i64: 8, 1024>}, {pipeline_mode = #tpu.pipeline_mode<synchronous>, transform_indices = @transform_1, window_bounds = array<i64: 1024, 32>}, {pipeline_mode = #tpu.pipeline_mode<synchronous>, transform_indices = @transform_2, window_bounds = array<i64: 5, 32, 32>}, {pipeline_mode = #tpu.pipeline_mode<synchronous>, transform_indices = @transform_3, window_bounds = array<i64: 8, 32>}, {transform_indices = @transform_4, window_bounds = array<i64: 8, 32>}]} {
    %c0 = arith.constant 0 : index
    %c0_0 = arith.constant 0 : index
    %0 = vector.load %arg4[%c0, %c0_0] : memref<8x32xf32, #tpu.memory_space<vmem>>, vector<8x32xf32>
    %c0_1 = arith.constant 0 : index
    %c0_2 = arith.constant 0 : index
    %1 = vector.load %arg1[%c0_1, %c0_2] : memref<8x1024xbf16, #tpu.memory_space<vmem>>, vector<8x1024xbf16>
    %c0_3 = arith.constant 0 : index
    %c0_4 = arith.constant 0 : index
    %2 = vector.load %arg2[%c0_3, %c0_4] : memref<1024x32xbf16, #tpu.memory_space<vmem>>, vector<1024x32xbf16>
    %cst = arith.constant dense<0.000000e+00> : vector<8x32xf32>
    %3 = tpu.matmul %1, %2, %cst {dimension_numbers = #tpu.dot_dimension_numbers<[1], [0], [0], [1], [0, 0, 1, 1], [], []>} : vector<8x1024xbf16>, vector<1024x32xbf16>, vector<8x32xf32> -> vector<8x32xf32>
    %4 = vector.extract_strided_slice %0 {offsets = [0, 0], sizes = [1, 32], strides = [1, 1]} : vector<8x32xf32> to vector<1x32xf32>
    %5 = vector.broadcast %4 : vector<1x32xf32> to vector<8x32xf32>
    %6 = arith.addf %3, %5 : vector<8x32xf32>
    %7 = arith.negf %6 : vector<8x32xf32>
    %8 = math.exp %7 : vector<8x32xf32>
    %cst_5 = arith.constant 1.000000e+00 : f32
    %9 = vector.broadcast %cst_5 : f32 to vector<8x32xf32>
    %10 = arith.addf %9, %8 : vector<8x32xf32>
    %11 = arith.divf %9, %10 : vector<8x32xf32>
    %12 = arith.truncf %11 : vector<8x32xf32> to vector<8x32xbf16>
    %c0_6 = arith.constant 0 : index
    %c0_7 = arith.constant 0 : index
    %c0_8 = arith.constant 0 : index
    %13 = vector.load %arg3[%c0_6, %c0_7, %c0_8] : memref<5x32x32xbf16, #tpu.memory_space<vmem>>, vector<1x32x32xbf16>
    %14 = vector.shape_cast %13 : vector<1x32x32xbf16> to vector<32x32xbf16>
    %cst_9 = arith.constant dense<0.000000e+00> : vector<8x32xf32>
    %15 = tpu.matmul %12, %14, %cst_9 {dimension_numbers = #tpu.dot_dimension_numbers<[1], [0], [0], [1], [0, 0, 1, 1], [], []>} : vector<8x32xbf16>, vector<32x32xbf16>, vector<8x32xf32> -> vector<8x32xf32>
    %16 = vector.extract_strided_slice %0 {offsets = [1, 0], sizes = [1, 32], strides = [1, 1]} : vector<8x32xf32> to vector<1x32xf32>
    %17 = vector.broadcast %16 : vector<1x32xf32> to vector<8x32xf32>
    %18 = arith.addf %15, %17 : vector<8x32xf32>
    %19 = arith.negf %18 : vector<8x32xf32>
    %20 = math.exp %19 : vector<8x32xf32>
    %cst_10 = arith.constant 1.000000e+00 : f32
    %21 = vector.broadcast %cst_10 : f32 to vector<8x32xf32>
    %22 = arith.addf %21, %20 : vector<8x32xf32>
    %23 = arith.divf %21, %22 : vector<8x32xf32>
    %24 = arith.truncf %23 : vector<8x32xf32> to vector<8x32xbf16>
    %c1 = arith.constant 1 : index
    %c0_11 = arith.constant 0 : index
    %c0_12 = arith.constant 0 : index
    %25 = vector.load %arg3[%c1, %c0_11, %c0_12] : memref<5x32x32xbf16, #tpu.memory_space<vmem>>, vector<1x32x32xbf16>
    %26 = vector.shape_cast %25 : vector<1x32x32xbf16> to vector<32x32xbf16>
    %cst_13 = arith.constant dense<0.000000e+00> : vector<8x32xf32>
    %27 = tpu.matmul %24, %26, %cst_13 {dimension_numbers = #tpu.dot_dimension_numbers<[1], [0], [0], [1], [0, 0, 1, 1], [], []>} : vector<8x32xbf16>, vector<32x32xbf16>, vector<8x32xf32> -> vector<8x32xf32>
    %28 = vector.extract_strided_slice %0 {offsets = [2, 0], sizes = [1, 32], strides = [1, 1]} : vector<8x32xf32> to vector<1x32xf32>
    %29 = vector.broadcast %28 : vector<1x32xf32> to vector<8x32xf32>
    %30 = arith.addf %27, %29 : vector<8x32xf32>
    %31 = arith.negf %30 : vector<8x32xf32>
    %32 = math.exp %31 : vector<8x32xf32>
    %cst_14 = arith.constant 1.000000e+00 : f32
    %33 = vector.broadcast %cst_14 : f32 to vector<8x32xf32>
    %34 = arith.addf %33, %32 : vector<8x32xf32>
    %35 = arith.divf %33, %34 : vector<8x32xf32>
    %36 = arith.truncf %35 : vector<8x32xf32> to vector<8x32xbf16>
    %c2 = arith.constant 2 : index
    %c0_15 = arith.constant 0 : index
    %c0_16 = arith.constant 0 : index
    %37 = vector.load %arg3[%c2, %c0_15, %c0_16] : memref<5x32x32xbf16, #tpu.memory_space<vmem>>, vector<1x32x32xbf16>
    %38 = vector.shape_cast %37 : vector<1x32x32xbf16> to vector<32x32xbf16>
    %cst_17 = arith.constant dense<0.000000e+00> : vector<8x32xf32>
    %39 = tpu.matmul %36, %38, %cst_17 {dimension_numbers = #tpu.dot_dimension_numbers<[1], [0], [0], [1], [0, 0, 1, 1], [], []>} : vector<8x32xbf16>, vector<32x32xbf16>, vector<8x32xf32> -> vector<8x32xf32>
    %40 = vector.extract_strided_slice %0 {offsets = [3, 0], sizes = [1, 32], strides = [1, 1]} : vector<8x32xf32> to vector<1x32xf32>
    %41 = vector.broadcast %40 : vector<1x32xf32> to vector<8x32xf32>
    %42 = arith.addf %39, %41 : vector<8x32xf32>
    %43 = arith.negf %42 : vector<8x32xf32>
    %44 = math.exp %43 : vector<8x32xf32>
    %cst_18 = arith.constant 1.000000e+00 : f32
    %45 = vector.broadcast %cst_18 : f32 to vector<8x32xf32>
    %46 = arith.addf %45, %44 : vector<8x32xf32>
    %47 = arith.divf %45, %46 : vector<8x32xf32>
    %48 = arith.truncf %47 : vector<8x32xf32> to vector<8x32xbf16>
    %c3 = arith.constant 3 : index
    %c0_19 = arith.constant 0 : index
    %c0_20 = arith.constant 0 : index
    %49 = vector.load %arg3[%c3, %c0_19, %c0_20] : memref<5x32x32xbf16, #tpu.memory_space<vmem>>, vector<1x32x32xbf16>
    %50 = vector.shape_cast %49 : vector<1x32x32xbf16> to vector<32x32xbf16>
    %cst_21 = arith.constant dense<0.000000e+00> : vector<8x32xf32>
    %51 = tpu.matmul %48, %50, %cst_21 {dimension_numbers = #tpu.dot_dimension_numbers<[1], [0], [0], [1], [0, 0, 1, 1], [], []>} : vector<8x32xbf16>, vector<32x32xbf16>, vector<8x32xf32> -> vector<8x32xf32>
    %52 = vector.extract_strided_slice %0 {offsets = [4, 0], sizes = [1, 32], strides = [1, 1]} : vector<8x32xf32> to vector<1x32xf32>
    %53 = vector.broadcast %52 : vector<1x32xf32> to vector<8x32xf32>
    %54 = arith.addf %51, %53 : vector<8x32xf32>
    %55 = arith.negf %54 : vector<8x32xf32>
    %56 = math.exp %55 : vector<8x32xf32>
    %cst_22 = arith.constant 1.000000e+00 : f32
    %57 = vector.broadcast %cst_22 : f32 to vector<8x32xf32>
    %58 = arith.addf %57, %56 : vector<8x32xf32>
    %59 = arith.divf %57, %58 : vector<8x32xf32>
    %60 = arith.truncf %59 : vector<8x32xf32> to vector<8x32xbf16>
    %c4 = arith.constant 4 : index
    %c0_23 = arith.constant 0 : index
    %c0_24 = arith.constant 0 : index
    %61 = vector.load %arg3[%c4, %c0_23, %c0_24] : memref<5x32x32xbf16, #tpu.memory_space<vmem>>, vector<1x32x32xbf16>
    %62 = vector.shape_cast %61 : vector<1x32x32xbf16> to vector<32x32xbf16>
    %cst_25 = arith.constant dense<0.000000e+00> : vector<8x32xf32>
    %63 = tpu.matmul %60, %62, %cst_25 {dimension_numbers = #tpu.dot_dimension_numbers<[1], [0], [0], [1], [0, 0, 1, 1], [], []>} : vector<8x32xbf16>, vector<32x32xbf16>, vector<8x32xf32> -> vector<8x32xf32>
    %64 = vector.extract_strided_slice %0 {offsets = [5, 0], sizes = [1, 32], strides = [1, 1]} : vector<8x32xf32> to vector<1x32xf32>
    %65 = vector.broadcast %64 : vector<1x32xf32> to vector<8x32xf32>
    %66 = arith.addf %63, %65 : vector<8x32xf32>
    %c0_26 = arith.constant 0 : index
    %c0_27 = arith.constant 0 : index
    %67 = vector.load %arg5[%c0_26, %c0_27] : memref<8x32xf32, #tpu.memory_space<vmem>>, vector<8x32xf32>
    tpu.vector_store %arg5[%c0_26, %c0_27], %66 {strides = array<i32>} : memref<8x32xf32, #tpu.memory_space<vmem>>, vector<8x32xf32>,
    return
  }
  func.func @transform_0(%arg0: i32) -> (i32, i32) {
    %c0_i32 = arith.constant 0 : i32
    %c0_i32_0 = arith.constant 0 : i32
    return %arg0, %c0_i32 : i32, i32
  }
  func.func @transform_1(%arg0: i32) -> (i32, i32) {
    %c0_i32 = arith.constant 0 : i32
    %c0_i32_0 = arith.constant 0 : i32
    %c0_i32_1 = arith.constant 0 : i32
    return %c0_i32, %c0_i32_0 : i32, i32
  }
  func.func @transform_2(%arg0: i32) -> (i32, i32, i32) {
    %c0_i32 = arith.constant 0 : i32
    %c0_i32_0 = arith.constant 0 : i32
    %c0_i32_1 = arith.constant 0 : i32
    %c0_i32_2 = arith.constant 0 : i32
    return %c0_i32, %c0_i32_0, %c0_i32_1 : i32, i32, i32
  }
  func.func @transform_3(%arg0: i32) -> (i32, i32) {
    %c0_i32 = arith.constant 0 : i32
    %c0_i32_0 = arith.constant 0 : i32
    %c0_i32_1 = arith.constant 0 : i32
    return %c0_i32, %c0_i32_0 : i32, i32
  }
  func.func @transform_4(%arg0: i32) -> (i32, i32) {
    %c0_i32 = arith.constant 0 : i32
    %c0_i32_0 = arith.constant 0 : i32
    return %arg0, %c0_i32 : i32, i32
  }
}

</mosaic_0001>

<llo_original>
// kernel: mlp_forward.1
$region0: #{mlp_forward.1}
  #allocation0 [shape = 'u32[]', space=smem, size = 0x4, offset = 0x4, fixed_abs, tag = 'smem constant byte address 0x4 - core index']
  #allocation1 [shape = 'u32[144,128]{1,0:T(1,128)}', space=vmem, size = 0x12000, scoped, tag = 'internal scratch']
  %s0 = inlined_call_operand.vmem [shape: bf16[8,1024], index: 0, kind: input, shape index: {}]
  %s1 = inlined_call_operand.vmem [shape: bf16[1024,32], index: 1, kind: input, shape index: {}]
  %s2 = inlined_call_operand.vmem [shape: bf16[5,32,32], index: 2, kind: input, shape index: {}]
  %s3 = inlined_call_operand.vmem [shape: f32[8,32], index: 3, kind: input, shape index: {}]
  %s4 = inlined_call_operand.hbm [shape: f32[8,32], index: 4, kind: output, shape index: {}]
  %s5 = sld [smem:[#allocation0]]
  $region26: #{mlp_forward.1} parent=0
    _
  %s7 = ssub.s32 1, %s5
  %s8 = scalar_select 0, %s7, %s5
  $region1: #{mlp_forward.1} parent=0
    #allocation2 [shape = 'u8[4096]{0}', space=vmem, size = 0x1000, scoped, tag = 'output window, operand 0, single buffered']
    #allocation3 [shape = 's32[1]{0}', space=sflag, size = 0x4, scoped, tag = 'scoped memory for mlp_forward.1']
    %9 = vsyncpa [#allocation3], 0
    // Predicated region
    $region2: #{mlp_forward.1} parent=1 // pred_check
      _
    $region3: #{mlp_forward.1} parent=1 // pred_check_branch
      %11 = sbr.rel (0) target = $region5
    $region4: #{mlp_forward.1} parent=1 // pred_region
      _
    $region5: #{mlp_forward.1} parent=1 // pred_fallthru
      _
    // Predicated region
    $region6: #{mlp_forward.1} parent=1 // pred_check
      _
    $region7: #{mlp_forward.1} parent=1 // pred_check_branch
      %13 = sbr.rel (0) target = $region9
    $region8: #{mlp_forward.1} parent=1 // pred_region
      _
    $region9: #{mlp_forward.1} parent=1 // pred_fallthru
      _
    // Predicated region
    $region10: #{mlp_forward.1} parent=1 // pred_check
      _
    $region11: #{mlp_forward.1} parent=1 // pred_check_branch
      %15 = sbr.rel (0) target = $region13
    $region12: #{mlp_forward.1} parent=1 // pred_region
      _
    $region13: #{mlp_forward.1} parent=1 // pred_fallthru
      _
    // Predicated region
    $region14: #{mlp_forward.1} parent=1 // pred_check
      _
    $region15: #{mlp_forward.1} parent=1 // pred_check_branch
      %17 = sbr.rel (0) target = $region17
    $region16: #{mlp_forward.1} parent=1 // pred_region
      _
    $region17: #{mlp_forward.1} parent=1 // pred_fallthru
      _
    %v19 = vld [vmem:[%s3] sm:$0xff]
    %v20 = vld [vmem:[%s0] sm:$0xff]
    %v21 = vld [vmem:[%s0 + $0x8] sm:$0xff]
    %v22 = vld [vmem:[%s0 + $0x10] sm:$0xff]
    %v23 = vld [vmem:[%s0 + $0x18] sm:$0xff]
    %v24 = vld [vmem:[%s1] sm:$0xf]
    %v25 = vld [vmem:[%s1 + $0x4] sm:$0xf]
    %v26 = vld [vmem:[%s1 + $0x8] sm:$0xf]
    %v27 = vld [vmem:[%s1 + $0xc] sm:$0xf]
    %v28 = vld [vmem:[%s1 + $0x10] sm:$0xf]
    %v29 = vld [vmem:[%s1 + $0x14] sm:$0xf]
    %v30 = vld [vmem:[%s1 + $0x18] sm:$0xf]
    %v31 = vld [vmem:[%s1 + $0x1c] sm:$0xf]
    %v32 = vld [vmem:[%s1 + $0x20] sm:$0xf]
    %v33 = vld [vmem:[%s1 + $0x24] sm:$0xf]
    %v34 = vld [vmem:[%s1 + $0x28] sm:$0xf]
    %v35 = vld [vmem:[%s1 + $0x2c] sm:$0xf]
    %v36 = vld [vmem:[%s1 + $0x30] sm:$0xf]
    %v37 = vld [vmem:[%s1 + $0x34] sm:$0xf]
    %v38 = vld [vmem:[%s1 + $0x38] sm:$0xf]
    %v39 = vld [vmem:[%s1 + $0x3c] sm:$0xf]
    %v40 = vld [vmem:[%s1 + $0x40] sm:$0xf]
    %v41 = vld [vmem:[%s1 + $0x44] sm:$0xf]
    %v42 = vld [vmem:[%s1 + $0x48] sm:$0xf]
    %v43 = vld [vmem:[%s1 + $0x4c] sm:$0xf]
    %v44 = vld [vmem:[%s1 + $0x50] sm:$0xf]
    %v45 = vld [vmem:[%s1 + $0x54] sm:$0xf]
    %v46 = vld [vmem:[%s1 + $0x58] sm:$0xf]
    %v47 = vld [vmem:[%s1 + $0x5c] sm:$0xf]
    %v48 = vld [vmem:[%s1 + $0x60] sm:$0xf]
    %v49 = vld [vmem:[%s1 + $0x64] sm:$0xf]
    %v50 = vld [vmem:[%s1 + $0x68] sm:$0xf]
    %v51 = vld [vmem:[%s1 + $0x6c] sm:$0xf]
    %v52 = vld [vmem:[%s1 + $0x70] sm:$0xf]
    %v53 = vld [vmem:[%s1 + $0x74] sm:$0xf]
    %v54 = vld [vmem:[%s1 + $0x78] sm:$0xf]
    %v55 = vld [vmem:[%s1 + $0x7c] sm:$0xf]
    %v56 = vld [vmem:[%s1 + $0x80] sm:$0xf]
    %v57 = vld [vmem:[%s1 + $0x84] sm:$0xf]
    %v58 = vld [vmem:[%s1 + $0x88] sm:$0xf]
    %v59 = vld [vmem:[%s1 + $0x8c] sm:$0xf]
    %v60 = vld [vmem:[%s1 + $0x90] sm:$0xf]
    %v61 = vld [vmem:[%s1 + $0x94] sm:$0xf]
    %v62 = vld [vmem:[%s1 + $0x98] sm:$0xf]
    %v63 = vld [vmem:[%s1 + $0x9c] sm:$0xf]
    %v64 = vld [vmem:[%s1 + $0xa0] sm:$0xf]
    %v65 = vld [vmem:[%s1 + $0xa4] sm:$0xf]
    %v66 = vld [vmem:[%s1 + $0xa8] sm:$0xf]
    %v67 = vld [vmem:[%s1 + $0xac] sm:$0xf]
    %v68 = vld [vmem:[%s1 + $0xb0] sm:$0xf]
    %v69 = vld [vmem:[%s1 + $0xb4] sm:$0xf]
    %v70 = vld [vmem:[%s1 + $0xb8] sm:$0xf]
    %v71 = vld [vmem:[%s1 + $0xbc] sm:$0xf]
    %v72 = vld [vmem:[%s1 + $0xc0] sm:$0xf]
    %v73 = vld [vmem:[%s1 + $0xc4] sm:$0xf]
    %v74 = vld [vmem:[%s1 + $0xc8] sm:$0xf]
    %v75 = vld [vmem:[%s1 + $0xcc] sm:$0xf]
    %v76 = vld [vmem:[%s1 + $0xd0] sm:$0xf]
    %v77 = vld [vmem:[%s1 + $0xd4] sm:$0xf]
    %v78 = vld [vmem:[%s1 + $0xd8] sm:$0xf]
    %v79 = vld [vmem:[%s1 + $0xdc] sm:$0xf]
    %v80 = vld [vmem:[%s1 + $0xe0] sm:$0xf]
    %v81 = vld [vmem:[%s1 + $0xe4] sm:$0xf]
    %v82 = vld [vmem:[%s1 + $0xe8] sm:$0xf]
    %v83 = vld [vmem:[%s1 + $0xec] sm:$0xf]
    %v84 = vld [vmem:[%s1 + $0xf0] sm:$0xf]
    %v85 = vld [vmem:[%s1 + $0xf4] sm:$0xf]
    %v86 = vld [vmem:[%s1 + $0xf8] sm:$0xf]
    %v87 = vld [vmem:[%s1 + $0xfc] sm:$0xf]
    %v88 = vld [vmem:[%s1 + $0x100] sm:$0xf]
    %v89 = vld [vmem:[%s1 + $0x104] sm:$0xf]
    %v90 = vld [vmem:[%s1 + $0x108] sm:$0xf]
    %v91 = vld [vmem:[%s1 + $0x10c] sm:$0xf]
    %v92 = vld [vmem:[%s1 + $0x110] sm:$0xf]
    %v93 = vld [vmem:[%s1 + $0x114] sm:$0xf]
    %v94 = vld [vmem:[%s1 + $0x118] sm:$0xf]
    %v95 = vld [vmem:[%s1 + $0x11c] sm:$0xf]
    %v96 = vld [vmem:[%s1 + $0x120] sm:$0xf]
    %v97 = vld [vmem:[%s1 + $0x124] sm:$0xf]
    %v98 = vld [vmem:[%s1 + $0x128] sm:$0xf]
    %v99 = vld [vmem:[%s1 + $0x12c] sm:$0xf]
    %v100 = vld [vmem:[%s1 + $0x130] sm:$0xf]
    %v101 = vld [vmem:[%s1 + $0x134] sm:$0xf]
    %v102 = vld [vmem:[%s1 + $0x138] sm:$0xf]
    %v103 = vld [vmem:[%s1 + $0x13c] sm:$0xf]
    %v104 = vld [vmem:[%s1 + $0x140] sm:$0xf]
    %v105 = vld [vmem:[%s1 + $0x144] sm:$0xf]
    %v106 = vld [vmem:[%s1 + $0x148] sm:$0xf]
    %v107 = vld [vmem:[%s1 + $0x14c] sm:$0xf]
    %v108 = vld [vmem:[%s1 + $0x150] sm:$0xf]
    %v109 = vld [vmem:[%s1 + $0x154] sm:$0xf]
    %v110 = vld [vmem:[%s1 + $0x158] sm:$0xf]
    %v111 = vld [vmem:[%s1 + $0x15c] sm:$0xf]
    %v112 = vld [vmem:[%s1 + $0x160] sm:$0xf]
    %v113 = vld [vmem:[%s1 + $0x164] sm:$0xf]
    %v114 = vld [vmem:[%s1 + $0x168] sm:$0xf]
    %v115 = vld [vmem:[%s1 + $0x16c] sm:$0xf]
    %v116 = vld [vmem:[%s1 + $0x170] sm:$0xf]
    %v117 = vld [vmem:[%s1 + $0x174] sm:$0xf]
    %v118 = vld [vmem:[%s1 + $0x178] sm:$0xf]
    %v119 = vld [vmem:[%s1 + $0x17c] sm:$0xf]
    %v120 = vld [vmem:[%s1 + $0x180] sm:$0xf]
    %v121 = vld [vmem:[%s1 + $0x184] sm:$0xf]
    %v122 = vld [vmem:[%s1 + $0x188] sm:$0xf]
    %v123 = vld [vmem:[%s1 + $0x18c] sm:$0xf]
    %v124 = vld [vmem:[%s1 + $0x190] sm:$0xf]
    %v125 = vld [vmem:[%s1 + $0x194] sm:$0xf]
    %v126 = vld [vmem:[%s1 + $0x198] sm:$0xf]
    %v127 = vld [vmem:[%s1 + $0x19c] sm:$0xf]
    %v128 = vld [vmem:[%s1 + $0x1a0] sm:$0xf]
    %v129 = vld [vmem:[%s1 + $0x1a4] sm:$0xf]
    %v130 = vld [vmem:[%s1 + $0x1a8] sm:$0xf]
    %v131 = vld [vmem:[%s1 + $0x1ac] sm:$0xf]
    %v132 = vld [vmem:[%s1 + $0x1b0] sm:$0xf]
    %v133 = vld [vmem:[%s1 + $0x1b4] sm:$0xf]
    %v134 = vld [vmem:[%s1 + $0x1b8] sm:$0xf]
    %v135 = vld [vmem:[%s1 + $0x1bc] sm:$0xf]
    %v136 = vld [vmem:[%s1 + $0x1c0] sm:$0xf]
    %v137 = vld [vmem:[%s1 + $0x1c4] sm:$0xf]
    %v138 = vld [vmem:[%s1 + $0x1c8] sm:$0xf]
    %v139 = vld [vmem:[%s1 + $0x1cc] sm:$0xf]
    %v140 = vld [vmem:[%s1 + $0x1d0] sm:$0xf]
    %v141 = vld [vmem:[%s1 + $0x1d4] sm:$0xf]
    %v142 = vld [vmem:[%s1 + $0x1d8] sm:$0xf]
    %v143 = vld [vmem:[%s1 + $0x1dc] sm:$0xf]
    %v144 = vld [vmem:[%s1 + $0x1e0] sm:$0xf]
    %v145 = vld [vmem:[%s1 + $0x1e4] sm:$0xf]
    %v146 = vld [vmem:[%s1 + $0x1e8] sm:$0xf]
    %v147 = vld [vmem:[%s1 + $0x1ec] sm:$0xf]
    %v148 = vld [vmem:[%s1 + $0x1f0] sm:$0xf]
    %v149 = vld [vmem:[%s1 + $0x1f4] sm:$0xf]
    %v150 = vld [vmem:[%s1 + $0x1f8] sm:$0xf]
    %v151 = vld [vmem:[%s1 + $0x1fc] sm:$0xf]
    %v152 = vlaneseq
    %v153 = vshrl.u32 %v152, 7
    %v154 = vsub.s32 0, %v153
    %v155 = vrot.slane %v19, %v154
    %v160 = vunpack.c.l.b16 %v20
    %v161 = vunpack.c.h.b16 %v20
    %v162 = vunpack.c.l.b16 %v21
    %v163 = vunpack.c.h.b16 %v21
    %v164 = vunpack.c.l.b16 %v22
    %v165 = vunpack.c.h.b16 %v22
    %v166 = vunpack.c.l.b16 %v23
    %v167 = vunpack.c.h.b16 %v23
    %v168 = vpack.c.b16 %v160, %v160
    %v169 = vpack.c.b16 %v161, %v161
    %v170 = vpack.c.b16 %v162, %v162
    %v171 = vpack.c.b16 %v163, %v163
    %v172 = vpack.c.b16 %v164, %v164
    %v173 = vpack.c.b16 %v165, %v165
    %v174 = vpack.c.b16 %v166, %v166
    %v175 = vpack.c.b16 %v167, %v167
    %v312 = vunpack.c.l.b16 %v24
    %v313 = vunpack.c.l.b16 %v25
    %v314 = vunpack.c.l.b16 %v26
    %v315 = vunpack.c.l.b16 %v27
    %v316 = vunpack.c.l.b16 %v28
    %v317 = vunpack.c.l.b16 %v29
    %v318 = vunpack.c.l.b16 %v30
    %v319 = vunpack.c.l.b16 %v31
    %v320 = vunpack.c.l.b16 %v32
    %v321 = vunpack.c.l.b16 %v33
    %v322 = vunpack.c.l.b16 %v34
    %v323 = vunpack.c.l.b16 %v35
    %v324 = vunpack.c.l.b16 %v36
    %v325 = vunpack.c.l.b16 %v37
    %v326 = vunpack.c.l.b16 %v38
    %v327 = vunpack.c.l.b16 %v39
    %v328 = vunpack.c.l.b16 %v40
    %v329 = vunpack.c.l.b16 %v41
    %v330 = vunpack.c.l.b16 %v42
    %v331 = vunpack.c.l.b16 %v43
    %v332 = vunpack.c.l.b16 %v44
    %v333 = vunpack.c.l.b16 %v45
    %v334 = vunpack.c.l.b16 %v46
    %v335 = vunpack.c.l.b16 %v47
    %v336 = vunpack.c.l.b16 %v48
    %v337 = vunpack.c.l.b16 %v49
    %v338 = vunpack.c.l.b16 %v50
    %v339 = vunpack.c.l.b16 %v51
    %v340 = vunpack.c.l.b16 %v52
    %v341 = vunpack.c.l.b16 %v53
    %v342 = vunpack.c.l.b16 %v54
    %v343 = vunpack.c.l.b16 %v55
    %v344 = vunpack.c.l.b16 %v56
    %v345 = vunpack.c.l.b16 %v57
    %v346 = vunpack.c.l.b16 %v58
    %v347 = vunpack.c.l.b16 %v59
    %v348 = vunpack.c.l.b16 %v60
    %v349 = vunpack.c.l.b16 %v61
    %v350 = vunpack.c.l.b16 %v62
    %v351 = vunpack.c.l.b16 %v63
    %v352 = vunpack.c.l.b16 %v64
    %v353 = vunpack.c.l.b16 %v65
    %v354 = vunpack.c.l.b16 %v66
    %v355 = vunpack.c.l.b16 %v67
    %v356 = vunpack.c.l.b16 %v68
    %v357 = vunpack.c.l.b16 %v69
    %v358 = vunpack.c.l.b16 %v70
    %v359 = vunpack.c.l.b16 %v71
    %v360 = vunpack.c.l.b16 %v72
    %v361 = vunpack.c.l.b16 %v73
    %v362 = vunpack.c.l.b16 %v74
    %v363 = vunpack.c.l.b16 %v75
    %v364 = vunpack.c.l.b16 %v76
    %v365 = vunpack.c.l.b16 %v77
    %v366 = vunpack.c.l.b16 %v78
    %v367 = vunpack.c.l.b16 %v79
    %v368 = vunpack.c.l.b16 %v80
    %v369 = vunpack.c.l.b16 %v81
    %v370 = vunpack.c.l.b16 %v82
    %v371 = vunpack.c.l.b16 %v83
    %v372 = vunpack.c.l.b16 %v84
    %v373 = vunpack.c.l.b16 %v85
    %v374 = vunpack.c.l.b16 %v86
    %v375 = vunpack.c.l.b16 %v87
    %v376 = vunpack.c.l.b16 %v88
    %v377 = vunpack.c.l.b16 %v89
    %v378 = vunpack.c.l.b16 %v90
    %v379 = vunpack.c.l.b16 %v91
    %v380 = vunpack.c.l.b16 %v92
    %v381 = vunpack.c.l.b16 %v93
    %v382 = vunpack.c.l.b16 %v94
    %v383 = vunpack.c.l.b16 %v95
    %v384 = vunpack.c.l.b16 %v96
    %v385 = vunpack.c.l.b16 %v97
    %v386 = vunpack.c.l.b16 %v98
    %v387 = vunpack.c.l.b16 %v99
    %v388 = vunpack.c.l.b16 %v100
    %v389 = vunpack.c.l.b16 %v101
    %v390 = vunpack.c.l.b16 %v102
    %v391 = vunpack.c.l.b16 %v103
    %v392 = vunpack.c.l.b16 %v104
    %v393 = vunpack.c.l.b16 %v105
    %v394 = vunpack.c.l.b16 %v106
    %v395 = vunpack.c.l.b16 %v107
    %v396 = vunpack.c.l.b16 %v108
    %v397 = vunpack.c.l.b16 %v109
    %v398 = vunpack.c.l.b16 %v110
    %v399 = vunpack.c.l.b16 %v111
    %v400 = vunpack.c.l.b16 %v112
    %v401 = vunpack.c.l.b16 %v113
    %v402 = vunpack.c.l.b16 %v114
    %v403 = vunpack.c.l.b16 %v115
    %v404 = vunpack.c.l.b16 %v116
    %v405 = vunpack.c.l.b16 %v117
    %v406 = vunpack.c.l.b16 %v118
    %v407 = vunpack.c.l.b16 %v119
    %v408 = vunpack.c.l.b16 %v120
    %v409 = vunpack.c.l.b16 %v121
    %v410 = vunpack.c.l.b16 %v122
    %v411 = vunpack.c.l.b16 %v123
    %v412 = vunpack.c.l.b16 %v124
    %v413 = vunpack.c.l.b16 %v125
    %v414 = vunpack.c.l.b16 %v126
    %v415 = vunpack.c.l.b16 %v127
    %v416 = vunpack.c.l.b16 %v128
    %v417 = vunpack.c.l.b16 %v129
    %v418 = vunpack.c.l.b16 %v130
    %v419 = vunpack.c.l.b16 %v131
    %v420 = vunpack.c.l.b16 %v132
    %v421 = vunpack.c.l.b16 %v133
    %v422 = vunpack.c.l.b16 %v134
    %v423 = vunpack.c.l.b16 %v135
    %v424 = vunpack.c.l.b16 %v136
    %v425 = vunpack.c.l.b16 %v137
    %v426 = vunpack.c.l.b16 %v138
    %v427 = vunpack.c.l.b16 %v139
    %v428 = vunpack.c.l.b16 %v140
    %v429 = vunpack.c.l.b16 %v141
    %v430 = vunpack.c.l.b16 %v142
    %v431 = vunpack.c.l.b16 %v143
    %v432 = vunpack.c.l.b16 %v144
    %v433 = vunpack.c.l.b16 %v145
    %v434 = vunpack.c.l.b16 %v146
    %v435 = vunpack.c.l.b16 %v147
    %v436 = vunpack.c.l.b16 %v148
    %v437 = vunpack.c.l.b16 %v149
    %v438 = vunpack.c.l.b16 %v150
    %v439 = vunpack.c.l.b16 %v151
    %v440 = vpack.c.b16 %v313, %v312
    %v441 = vpack.c.b16 %v315, %v314
    %v442 = vpack.c.b16 %v317, %v316
    %v443 = vpack.c.b16 %v319, %v318
    %v444 = vpack.c.b16 %v321, %v320
    %v445 = vpack.c.b16 %v323, %v322
    %v446 = vpack.c.b16 %v325, %v324
    %v447 = vpack.c.b16 %v327, %v326
    %v448 = vpack.c.b16 %v329, %v328
    %v449 = vpack.c.b16 %v331, %v330
    %v450 = vpack.c.b16 %v333, %v332
    %v451 = vpack.c.b16 %v335, %v334
    %v452 = vpack.c.b16 %v337, %v336
    %v453 = vpack.c.b16 %v339, %v338
    %v454 = vpack.c.b16 %v341, %v340
    %v455 = vpack.c.b16 %v343, %v342
    %v456 = vpack.c.b16 %v345, %v344
    %v457 = vpack.c.b16 %v347, %v346
    %v458 = vpack.c.b16 %v349, %v348
    %v459 = vpack.c.b16 %v351, %v350
    %v460 = vpack.c.b16 %v353, %v352
    %v461 = vpack.c.b16 %v355, %v354
    %v462 = vpack.c.b16 %v357, %v356
    %v463 = vpack.c.b16 %v359, %v358
    %v464 = vpack.c.b16 %v361, %v360
    %v465 = vpack.c.b16 %v363, %v362
    %v466 = vpack.c.b16 %v365, %v364
    %v467 = vpack.c.b16 %v367, %v366
    %v468 = vpack.c.b16 %v369, %v368
    %v469 = vpack.c.b16 %v371, %v370
    %v470 = vpack.c.b16 %v373, %v372
    %v471 = vpack.c.b16 %v375, %v374
    %v472 = vpack.c.b16 %v377, %v376
    %v473 = vpack.c.b16 %v379, %v378
    %v474 = vpack.c.b16 %v381, %v380
    %v475 = vpack.c.b16 %v383, %v382
    %v476 = vpack.c.b16 %v385, %v384
    %v477 = vpack.c.b16 %v387, %v386
    %v478 = vpack.c.b16 %v389, %v388
    %v479 = vpack.c.b16 %v391, %v390
    %v480 = vpack.c.b16 %v393, %v392
    %v481 = vpack.c.b16 %v395, %v394
    %v482 = vpack.c.b16 %v397, %v396
    %v483 = vpack.c.b16 %v399, %v398
    %v484 = vpack.c.b16 %v401, %v400
    %v485 = vpack.c.b16 %v403, %v402
    %v486 = vpack.c.b16 %v405, %v404
    %v487 = vpack.c.b16 %v407, %v406
    %v488 = vpack.c.b16 %v409, %v408
    %v489 = vpack.c.b16 %v411, %v410
    %v490 = vpack.c.b16 %v413, %v412
    %v491 = vpack.c.b16 %v415, %v414
    %v492 = vpack.c.b16 %v417, %v416
    %v493 = vpack.c.b16 %v419, %v418
    %v494 = vpack.c.b16 %v421, %v420
    %v495 = vpack.c.b16 %v423, %v422
    %v496 = vpack.c.b16 %v425, %v424
    %v497 = vpack.c.b16 %v427, %v426
    %v498 = vpack.c.b16 %v429, %v428
    %v499 = vpack.c.b16 %v431, %v430
    %v500 = vpack.c.b16 %v433, %v432
    %v501 = vpack.c.b16 %v435, %v434
    %v502 = vpack.c.b16 %v437, %v436
    %v503 = vpack.c.b16 %v439, %v438
    %568 = vmatprep.subr.bf16.mxu0 0
    %569 = vmatpush1.bf16.msra.mxu0 %v440
    %570 = vmatprep.subr.bf16.mxu0 0
    %571 = vmatpush1.bf16.msra.mxu0 %v441
    %572 = vmatprep.subr.bf16.mxu0 0
    %573 = vmatpush1.bf16.msra.mxu0 %v442
    %574 = vmatprep.subr.bf16.mxu0 0
    %575 = vmatpush1.bf16.msra.mxu0 %v443
    %576 = vmatprep.subr.bf16.mxu0 0
    %577 = vmatpush1.bf16.msra.mxu0 %v444
    %578 = vmatprep.subr.bf16.mxu0 0
    %579 = vmatpush1.bf16.msra.mxu0 %v445
    %580 = vmatprep.subr.bf16.mxu0 0
    %581 = vmatpush1.bf16.msra.mxu0 %v446
    %582 = vmatprep.subr.bf16.mxu0 0
    %583 = vmatpush1.bf16.msra.mxu0 %v447
    %584 = vmatprep.subr.bf16.mxu0 0
    %585 = vmatpush1.bf16.msra.mxu0 %v448
    %586 = vmatprep.subr.bf16.mxu0 0
    %587 = vmatpush1.bf16.msra.mxu0 %v449
    %588 = vmatprep.subr.bf16.mxu0 0
    %589 = vmatpush1.bf16.msra.mxu0 %v450
    %590 = vmatprep.subr.bf16.mxu0 0
    %591 = vmatpush1.bf16.msra.mxu0 %v451
    %592 = vmatprep.subr.bf16.mxu0 0
    %593 = vmatpush1.bf16.msra.mxu0 %v452
    %594 = vmatprep.subr.bf16.mxu0 0
    %595 = vmatpush1.bf16.msra.mxu0 %v453
    %596 = vmatprep.subr.bf16.mxu0 0
    %597 = vmatpush1.bf16.msra.mxu0 %v454
    %598 = vmatprep.subr.bf16.mxu0 0
    %599 = vmatpush1.bf16.msra.mxu0 %v455
    %600 = vmatprep.mubr.bf16.mxu0 %v169
    %601 = vmatmul.mubr.bf16.gmra.mrb[0].mxu0 %v168
    %v602 = vpop.f32.mrb[0].mxu0
    %v603 = vadd.f32 %v155, %v602
    %v604 = vpop.f32.mrb[0].mxu0
    %v605 = vpop.f32.mrb[0].mxu0
    %v606 = vpop.f32.mrb[0].mxu0
    %607 = vdwg.mxu0
    %608 = vmatprep.subr.bf16.mxu0 0
    %609 = vmatpush1.bf16.msra.mxu0 %v456
    %610 = vmatprep.subr.bf16.mxu0 0
    %611 = vmatpush1.bf16.msra.mxu0 %v457
    %612 = vmatprep.subr.bf16.mxu0 0
    %613 = vmatpush1.bf16.msra.mxu0 %v458
    %614 = vmatprep.subr.bf16.mxu0 0
    %615 = vmatpush1.bf16.msra.mxu0 %v459
    %616 = vmatprep.subr.bf16.mxu0 0
    %617 = vmatpush1.bf16.msra.mxu0 %v460
    %618 = vmatprep.subr.bf16.mxu0 0
    %619 = vmatpush1.bf16.msra.mxu0 %v461
    %620 = vmatprep.subr.bf16.mxu0 0
    %621 = vmatpush1.bf16.msra.mxu0 %v462
    %622 = vmatprep.subr.bf16.mxu0 0
    %623 = vmatpush1.bf16.msra.mxu0 %v463
    %624 = vmatprep.subr.bf16.mxu0 0
    %625 = vmatpush1.bf16.msra.mxu0 %v464
    %626 = vmatprep.subr.bf16.mxu0 0
    %627 = vmatpush1.bf16.msra.mxu0 %v465
    %628 = vmatprep.subr.bf16.mxu0 0
    %629 = vmatpush1.bf16.msra.mxu0 %v466
    %630 = vmatprep.subr.bf16.mxu0 0
    %631 = vmatpush1.bf16.msra.mxu0 %v467
    %632 = vmatprep.subr.bf16.mxu0 0
    %633 = vmatpush1.bf16.msra.mxu0 %v468
    %634 = vmatprep.subr.bf16.mxu0 0
    %635 = vmatpush1.bf16.msra.mxu0 %v469
    %636 = vmatprep.subr.bf16.mxu0 0
    %637 = vmatpush1.bf16.msra.mxu0 %v470
    %638 = vmatprep.subr.bf16.mxu0 0
    %639 = vmatpush1.bf16.msra.mxu0 %v471
    %640 = vmatprep.mubr.bf16.mxu0 %v171
    %641 = vmatmul.mubr.bf16.gmra.mrb[0].mxu0 %v170
    %v642 = vpop.f32.mrb[0].mxu0
    %v643 = vadd.f32 %v603, %v642
    %v644 = vpop.f32.mrb[0].mxu0
    %v645 = vpop.f32.mrb[0].mxu0
    %v646 = vpop.f32.mrb[0].mxu0
    %647 = vdwg.mxu0
    %648 = vmatprep.subr.bf16.mxu0 0
    %649 = vmatpush1.bf16.msra.mxu0 %v472
    %650 = vmatprep.subr.bf16.mxu0 0
    %651 = vmatpush1.bf16.msra.mxu0 %v473
    %652 = vmatprep.subr.bf16.mxu0 0
    %653 = vmatpush1.bf16.msra.mxu0 %v474
    %654 = vmatprep.subr.bf16.mxu0 0
    %655 = vmatpush1.bf16.msra.mxu0 %v475
    %656 = vmatprep.subr.bf16.mxu0 0
    %657 = vmatpush1.bf16.msra.mxu0 %v476
    %658 = vmatprep.subr.bf16.mxu0 0
    %659 = vmatpush1.bf16.msra.mxu0 %v477
    %660 = vmatprep.subr.bf16.mxu0 0
    %661 = vmatpush1.bf16.msra.mxu0 %v478
    %662 = vmatprep.subr.bf16.mxu0 0
    %663 = vmatpush1.bf16.msra.mxu0 %v479
    %664 = vmatprep.subr.bf16.mxu0 0
    %665 = vmatpush1.bf16.msra.mxu0 %v480
    %666 = vmatprep.subr.bf16.mxu0 0
    %667 = vmatpush1.bf16.msra.mxu0 %v481
    %668 = vmatprep.subr.bf16.mxu0 0
    %669 = vmatpush1.bf16.msra.mxu0 %v482
    %670 = vmatprep.subr.bf16.mxu0 0
    %671 = vmatpush1.bf16.msra.mxu0 %v483
    %672 = vmatprep.subr.bf16.mxu0 0
    %673 = vmatpush1.bf16.msra.mxu0 %v484
    %674 = vmatprep.subr.bf16.mxu0 0
    %675 = vmatpush1.bf16.msra.mxu0 %v485
    %676 = vmatprep.subr.bf16.mxu0 0
    %677 = vmatpush1.bf16.msra.mxu0 %v486
    %678 = vmatprep.subr.bf16.mxu0 0
    %679 = vmatpush1.bf16.msra.mxu0 %v487
    %680 = vmatprep.mubr.bf16.mxu0 %v173
    %681 = vmatmul.mubr.bf16.gmra.mrb[0].mxu0 %v172
    %v682 = vpop.f32.mrb[0].mxu0
    %v683 = vadd.f32 %v643, %v682
    %v684 = vpop.f32.mrb[0].mxu0
    %v685 = vpop.f32.mrb[0].mxu0
    %v686 = vpop.f32.mrb[0].mxu0
    %687 = vdwg.mxu0
    %688 = vmatprep.subr.bf16.mxu0 0
    %689 = vmatpush1.bf16.msra.mxu0 %v488
    %690 = vmatprep.subr.bf16.mxu0 0
    %691 = vmatpush1.bf16.msra.mxu0 %v489
    %692 = vmatprep.subr.bf16.mxu0 0
    %693 = vmatpush1.bf16.msra.mxu0 %v490
    %694 = vmatprep.subr.bf16.mxu0 0
    %695 = vmatpush1.bf16.msra.mxu0 %v491
    %696 = vmatprep.subr.bf16.mxu0 0
    %697 = vmatpush1.bf16.msra.mxu0 %v492
    %698 = vmatprep.subr.bf16.mxu0 0
    %699 = vmatpush1.bf16.msra.mxu0 %v493
    %700 = vmatprep.subr.bf16.mxu0 0
    %701 = vmatpush1.bf16.msra.mxu0 %v494
    %702 = vmatprep.subr.bf16.mxu0 0
    %703 = vmatpush1.bf16.msra.mxu0 %v495
    %704 = vmatprep.subr.bf16.mxu0 0
    %705 = vmatpush1.bf16.msra.mxu0 %v496
    %706 = vmatprep.subr.bf16.mxu0 0
    %707 = vmatpush1.bf16.msra.mxu0 %v497
    %708 = vmatprep.subr.bf16.mxu0 0
    %709 = vmatpush1.bf16.msra.mxu0 %v498
    %710 = vmatprep.subr.bf16.mxu0 0
    %711 = vmatpush1.bf16.msra.mxu0 %v499
    %712 = vmatprep.subr.bf16.mxu0 0
    %713 = vmatpush1.bf16.msra.mxu0 %v500
    %714 = vmatprep.subr.bf16.mxu0 0
    %715 = vmatpush1.bf16.msra.mxu0 %v501
    %716 = vmatprep.subr.bf16.mxu0 0
    %717 = vmatpush1.bf16.msra.mxu0 %v502
    %718 = vmatprep.subr.bf16.mxu0 0
    %719 = vmatpush1.bf16.msra.mxu0 %v503
    %720 = vmatprep.mubr.bf16.mxu0 %v175
    %721 = vmatmul.mubr.bf16.gmra.mrb[0].mxu0 %v174
    %v722 = vpop.f32.mrb[0].mxu0
    %v723 = vadd.f32 %v683, %v722
    %v724 = vpop.f32.mrb[0].mxu0
    %v725 = vpop.f32.mrb[0].mxu0
    %v726 = vpop.f32.mrb[0].mxu0
    %727 = vdwg.mxu0
    %v728 = vxor.u32 %v723, 2147483648
    %v729 = vmul.f32 %v728, 1.442695
    %v730 = vpow.pop %v729
    %v731 = vadd.f32 %v730, 1.0
    %v732 = vrcp.pop %v731
    %v733 = vmul.f32 1.0, %v732
    %v734 = vpack.c.bf16 %v733, %v733
    %v735 = vld [vmem:[%s2] sm:$0xf]
    %v736 = vld [vmem:[%s2 + $0x4] sm:$0xf]
    %v737 = vld [vmem:[%s2 + $0x8] sm:$0xf]
    %v738 = vld [vmem:[%s2 + $0xc] sm:$0xf]
    %v739 = vlaneseq
    %v740 = vshrl.u32 %v739, 7
    %v741 = vsub.s32 1, %v740
    %v742 = vrot.slane %v19, %v741
    %v747 = vunpack.c.l.b16 %v735
    %v748 = vunpack.c.l.b16 %v736
    %v749 = vunpack.c.l.b16 %v737
    %v750 = vunpack.c.l.b16 %v738
    %v751 = vpack.c.b16 %v748, %v747
    %v752 = vpack.c.b16 %v750, %v749
    %vm755 = vcmask 261120
    %v757 = vsel %vm755, %v734, 0
    %759 = vmatprep.subr.bf16.mxu0 0
    %760 = vmatpush1.bf16.msra.mxu0 %v751
    %761 = vmatprep.subr.bf16.mxu0 0
    %762 = vmatpush1.bf16.msra.mxu0 %v752
    %763 = vmatprep.subr.bf16.mxu0 0
    %764 = vmatpush1.bf16.msra.mxu0 0
    %765 = vmatprep.subr.bf16.mxu0 0
    %766 = vmatpush1.bf16.msra.mxu0 0
    %767 = vmatprep.subr.bf16.mxu0 0
    %768 = vmatpush1.bf16.msra.mxu0 0
    %769 = vmatprep.subr.bf16.mxu0 0
    %770 = vmatpush1.bf16.msra.mxu0 0
    %771 = vmatprep.subr.bf16.mxu0 0
    %772 = vmatpush1.bf16.msra.mxu0 0
    %773 = vmatprep.subr.bf16.mxu0 0
    %774 = vmatpush1.bf16.msra.mxu0 0
    %775 = vmatprep.subr.bf16.mxu0 0
    %776 = vmatpush1.bf16.msra.mxu0 0
    %777 = vmatprep.subr.bf16.mxu0 0
    %778 = vmatpush1.bf16.msra.mxu0 0
    %779 = vmatprep.subr.bf16.mxu0 0
    %780 = vmatpush1.bf16.msra.mxu0 0
    %781 = vmatprep.subr.bf16.mxu0 0
    %782 = vmatpush1.bf16.msra.mxu0 0
    %783 = vmatprep.subr.bf16.mxu0 0
    %784 = vmatpush1.bf16.msra.mxu0 0
    %785 = vmatprep.subr.bf16.mxu0 0
    %786 = vmatpush1.bf16.msra.mxu0 0
    %787 = vmatprep.subr.bf16.mxu0 0
    %788 = vmatpush1.bf16.msra.mxu0 0
    %789 = vmatprep.subr.bf16.mxu0 0
    %790 = vmatpush1.bf16.msra.mxu0 0
    %791 = vmatprep.mubr.bf16.mxu0 0
    %792 = vmatmul.mubr.bf16.gmra.mrb[0].mxu0 %v757
    %v793 = vpop.f32.mrb[0].mxu0
    %v794 = vadd.f32 %v742, %v793
    %v795 = vpop.f32.mrb[0].mxu0
    %v796 = vpop.f32.mrb[0].mxu0
    %v797 = vpop.f32.mrb[0].mxu0
    %798 = vdwg.mxu0
    %v799 = vxor.u32 %v794, 2147483648
    %v800 = vmul.f32 %v799, 1.442695
    %v801 = vpow.pop %v800
    %v802 = vadd.f32 %v801, 1.0
    %v803 = vrcp.pop %v802
    %v804 = vmul.f32 1.0, %v803
    %v805 = vpack.c.bf16 %v804, %v804
    %s806 = scalar_lea.vmem %s2, 16
    %v807 = vld [vmem:[%s806] sm:$0xf]
    %v808 = vld [vmem:[%s806 + $0x4] sm:$0xf]
    %v809 = vld [vmem:[%s806 + $0x8] sm:$0xf]
    %v810 = vld [vmem:[%s806 + $0xc] sm:$0xf]
    %v811 = vlaneseq
    %v812 = vshrl.u32 %v811, 7
    %v813 = vsub.s32 2, %v812
    %v814 = vrot.slane %v19, %v813
    %v819 = vunpack.c.l.b16 %v807
    %v820 = vunpack.c.l.b16 %v808
    %v821 = vunpack.c.l.b16 %v809
    %v822 = vunpack.c.l.b16 %v810
    %v823 = vpack.c.b16 %v820, %v819
    %v824 = vpack.c.b16 %v822, %v821
    %v828 = vsel %vm755, %v805, 0
    %830 = vmatprep.subr.bf16.mxu0 0
    %831 = vmatpush1.bf16.msra.mxu0 %v823
    %832 = vmatprep.subr.bf16.mxu0 0
    %833 = vmatpush1.bf16.msra.mxu0 %v824
    %834 = vmatprep.subr.bf16.mxu0 0
    %835 = vmatpush1.bf16.msra.mxu0 0
    %836 = vmatprep.subr.bf16.mxu0 0
    %837 = vmatpush1.bf16.msra.mxu0 0
    %838 = vmatprep.subr.bf16.mxu0 0
    %839 = vmatpush1.bf16.msra.mxu0 0
    %840 = vmatprep.subr.bf16.mxu0 0
    %841 = vmatpush1.bf16.msra.mxu0 0
    %842 = vmatprep.subr.bf16.mxu0 0
    %843 = vmatpush1.bf16.msra.mxu0 0
    %844 = vmatprep.subr.bf16.mxu0 0
    %845 = vmatpush1.bf16.msra.mxu0 0
    %846 = vmatprep.subr.bf16.mxu0 0
    %847 = vmatpush1.bf16.msra.mxu0 0
    %848 = vmatprep.subr.bf16.mxu0 0
    %849 = vmatpush1.bf16.msra.mxu0 0
    %850 = vmatprep.subr.bf16.mxu0 0
    %851 = vmatpush1.bf16.msra.mxu0 0
    %852 = vmatprep.subr.bf16.mxu0 0
    %853 = vmatpush1.bf16.msra.mxu0 0
    %854 = vmatprep.subr.bf16.mxu0 0
    %855 = vmatpush1.bf16.msra.mxu0 0
    %856 = vmatprep.subr.bf16.mxu0 0
    %857 = vmatpush1.bf16.msra.mxu0 0
    %858 = vmatprep.subr.bf16.mxu0 0
    %859 = vmatpush1.bf16.msra.mxu0 0
    %860 = vmatprep.subr.bf16.mxu0 0
    %861 = vmatpush1.bf16.msra.mxu0 0
    %862 = vmatprep.mubr.bf16.mxu0 0
    %863 = vmatmul.mubr.bf16.gmra.mrb[0].mxu0 %v828
    %v864 = vpop.f32.mrb[0].mxu0
    %v865 = vadd.f32 %v814, %v864
    %v866 = vpop.f32.mrb[0].mxu0
    %v867 = vpop.f32.mrb[0].mxu0
    %v868 = vpop.f32.mrb[0].mxu0
    %869 = vdwg.mxu0
    %v870 = vxor.u32 %v865, 2147483648
    %v871 = vmul.f32 %v870, 1.442695
    %v872 = vpow.pop %v871
    %v873 = vadd.f32 %v872, 1.0
    %v874 = vrcp.pop %v873
    %v875 = vmul.f32 1.0, %v874
    %v876 = vpack.c.bf16 %v875, %v875
    %s877 = scalar_lea.vmem %s2, 32
    %v878 = vld [vmem:[%s877] sm:$0xf]
    %v879 = vld [vmem:[%s877 + $0x4] sm:$0xf]
    %v880 = vld [vmem:[%s877 + $0x8] sm:$0xf]
    %v881 = vld [vmem:[%s877 + $0xc] sm:$0xf]
    %v882 = vlaneseq
    %v883 = vshrl.u32 %v882, 7
    %v884 = vsub.s32 3, %v883
    %v885 = vrot.slane %v19, %v884
    %v890 = vunpack.c.l.b16 %v878
    %v891 = vunpack.c.l.b16 %v879
    %v892 = vunpack.c.l.b16 %v880
    %v893 = vunpack.c.l.b16 %v881
    %v894 = vpack.c.b16 %v891, %v890
    %v895 = vpack.c.b16 %v893, %v892
    %v899 = vsel %vm755, %v876, 0
    %901 = vmatprep.subr.bf16.mxu0 0
    %902 = vmatpush1.bf16.msra.mxu0 %v894
    %903 = vmatprep.subr.bf16.mxu0 0
    %904 = vmatpush1.bf16.msra.mxu0 %v895
    %905 = vmatprep.subr.bf16.mxu0 0
    %906 = vmatpush1.bf16.msra.mxu0 0
    %907 = vmatprep.subr.bf16.mxu0 0
    %908 = vmatpush1.bf16.msra.mxu0 0
    %909 = vmatprep.subr.bf16.mxu0 0
    %910 = vmatpush1.bf16.msra.mxu0 0
    %911 = vmatprep.subr.bf16.mxu0 0
    %912 = vmatpush1.bf16.msra.mxu0 0
    %913 = vmatprep.subr.bf16.mxu0 0
    %914 = vmatpush1.bf16.msra.mxu0 0
    %915 = vmatprep.subr.bf16.mxu0 0
    %916 = vmatpush1.bf16.msra.mxu0 0
    %917 = vmatprep.subr.bf16.mxu0 0
    %918 = vmatpush1.bf16.msra.mxu0 0
    %919 = vmatprep.subr.bf16.mxu0 0
    %920 = vmatpush1.bf16.msra.mxu0 0
    %921 = vmatprep.subr.bf16.mxu0 0
    %922 = vmatpush1.bf16.msra.mxu0 0
    %923 = vmatprep.subr.bf16.mxu0 0
    %924 = vmatpush1.bf16.msra.mxu0 0
    %925 = vmatprep.subr.bf16.mxu0 0
    %926 = vmatpush1.bf16.msra.mxu0 0
    %927 = vmatprep.subr.bf16.mxu0 0
    %928 = vmatpush1.bf16.msra.mxu0 0
    %929 = vmatprep.subr.bf16.mxu0 0
    %930 = vmatpush1.bf16.msra.mxu0 0
    %931 = vmatprep.subr.bf16.mxu0 0
    %932 = vmatpush1.bf16.msra.mxu0 0
    %933 = vmatprep.mubr.bf16.mxu0 0
    %934 = vmatmul.mubr.bf16.gmra.mrb[0].mxu0 %v899
    %v935 = vpop.f32.mrb[0].mxu0
    %v936 = vadd.f32 %v885, %v935
    %v937 = vpop.f32.mrb[0].mxu0
    %v938 = vpop.f32.mrb[0].mxu0
    %v939 = vpop.f32.mrb[0].mxu0
    %940 = vdwg.mxu0
    %v941 = vxor.u32 %v936, 2147483648
    %v942 = vmul.f32 %v941, 1.442695
    %v943 = vpow.pop %v942
    %v944 = vadd.f32 %v943, 1.0
    %v945 = vrcp.pop %v944
    %v946 = vmul.f32 1.0, %v945
    %v947 = vpack.c.bf16 %v946, %v946
    %s948 = scalar_lea.vmem %s2, 48
    %v949 = vld [vmem:[%s948] sm:$0xf]
    %v950 = vld [vmem:[%s948 + $0x4] sm:$0xf]
    %v951 = vld [vmem:[%s948 + $0x8] sm:$0xf]
    %v952 = vld [vmem:[%s948 + $0xc] sm:$0xf]
    %v953 = vlaneseq
    %v954 = vshrl.u32 %v953, 7
    %v955 = vsub.s32 4, %v954
    %v956 = vrot.slane %v19, %v955
    %v961 = vunpack.c.l.b16 %v949
    %v962 = vunpack.c.l.b16 %v950
    %v963 = vunpack.c.l.b16 %v951
    %v964 = vunpack.c.l.b16 %v952
    %v965 = vpack.c.b16 %v962, %v961
    %v966 = vpack.c.b16 %v964, %v963
    %v970 = vsel %vm755, %v947, 0
    %972 = vmatprep.subr.bf16.mxu0 0
    %973 = vmatpush1.bf16.msra.mxu0 %v965
    %974 = vmatprep.subr.bf16.mxu0 0
    %975 = vmatpush1.bf16.msra.mxu0 %v966
    %976 = vmatprep.subr.bf16.mxu0 0
    %977 = vmatpush1.bf16.msra.mxu0 0
    %978 = vmatprep.subr.bf16.mxu0 0
    %979 = vmatpush1.bf16.msra.mxu0 0
    %980 = vmatprep.subr.bf16.mxu0 0
    %981 = vmatpush1.bf16.msra.mxu0 0
    %982 = vmatprep.subr.bf16.mxu0 0
    %983 = vmatpush1.bf16.msra.mxu0 0
    %984 = vmatprep.subr.bf16.mxu0 0
    %985 = vmatpush1.bf16.msra.mxu0 0
    %986 = vmatprep.subr.bf16.mxu0 0
    %987 = vmatpush1.bf16.msra.mxu0 0
    %988 = vmatprep.subr.bf16.mxu0 0
    %989 = vmatpush1.bf16.msra.mxu0 0
    %990 = vmatprep.subr.bf16.mxu0 0
    %991 = vmatpush1.bf16.msra.mxu0 0
    %992 = vmatprep.subr.bf16.mxu0 0
    %993 = vmatpush1.bf16.msra.mxu0 0
    %994 = vmatprep.subr.bf16.mxu0 0
    %995 = vmatpush1.bf16.msra.mxu0 0
    %996 = vmatprep.subr.bf16.mxu0 0
    %997 = vmatpush1.bf16.msra.mxu0 0
    %998 = vmatprep.subr.bf16.mxu0 0
    %999 = vmatpush1.bf16.msra.mxu0 0
    %1000 = vmatprep.subr.bf16.mxu0 0
    %1001 = vmatpush1.bf16.msra.mxu0 0
    %1002 = vmatprep.subr.bf16.mxu0 0
    %1003 = vmatpush1.bf16.msra.mxu0 0
    %1004 = vmatprep.mubr.bf16.mxu0 0
    %1005 = vmatmul.mubr.bf16.gmra.mrb[0].mxu0 %v970
    %v1006 = vpop.f32.mrb[0].mxu0
    %v1007 = vadd.f32 %v956, %v1006
    %v1008 = vpop.f32.mrb[0].mxu0
    %v1009 = vpop.f32.mrb[0].mxu0
    %v1010 = vpop.f32.mrb[0].mxu0
    %1011 = vdwg.mxu0
    %v1012 = vxor.u32 %v1007, 2147483648
    %v1013 = vmul.f32 %v1012, 1.442695
    %v1014 = vpow.pop %v1013
    %v1015 = vadd.f32 %v1014, 1.0
    %v1016 = vrcp.pop %v1015
    %v1017 = vmul.f32 1.0, %v1016
    %v1018 = vpack.c.bf16 %v1017, %v1017
    %s1019 = scalar_lea.vmem %s2, 64
    %v1020 = vld [vmem:[%s1019] sm:$0xf]
    %v1021 = vld [vmem:[%s1019 + $0x4] sm:$0xf]
    %v1022 = vld [vmem:[%s1019 + $0x8] sm:$0xf]
    %v1023 = vld [vmem:[%s1019 + $0xc] sm:$0xf]
    %v1024 = vlaneseq
    %v1025 = vshrl.u32 %v1024, 7
    %v1026 = vsub.s32 5, %v1025
    %v1027 = vrot.slane %v19, %v1026
    %v1032 = vunpack.c.l.b16 %v1020
    %v1033 = vunpack.c.l.b16 %v1021
    %v1034 = vunpack.c.l.b16 %v1022
    %v1035 = vunpack.c.l.b16 %v1023
    %v1036 = vpack.c.b16 %v1033, %v1032
    %v1037 = vpack.c.b16 %v1035, %v1034
    %v1041 = vsel %vm755, %v1018, 0
    %1043 = vmatprep.subr.bf16.mxu0 0
    %1044 = vmatpush1.bf16.msra.mxu0 %v1036
    %1045 = vmatprep.subr.bf16.mxu0 0
    %1046 = vmatpush1.bf16.msra.mxu0 %v1037
    %1047 = vmatprep.subr.bf16.mxu0 0
    %1048 = vmatpush1.bf16.msra.mxu0 0
    %1049 = vmatprep.subr.bf16.mxu0 0
    %1050 = vmatpush1.bf16.msra.mxu0 0
    %1051 = vmatprep.subr.bf16.mxu0 0
    %1052 = vmatpush1.bf16.msra.mxu0 0
    %1053 = vmatprep.subr.bf16.mxu0 0
    %1054 = vmatpush1.bf16.msra.mxu0 0
    %1055 = vmatprep.subr.bf16.mxu0 0
    %1056 = vmatpush1.bf16.msra.mxu0 0
    %1057 = vmatprep.subr.bf16.mxu0 0
    %1058 = vmatpush1.bf16.msra.mxu0 0
    %1059 = vmatprep.subr.bf16.mxu0 0
    %1060 = vmatpush1.bf16.msra.mxu0 0
    %1061 = vmatprep.subr.bf16.mxu0 0
    %1062 = vmatpush1.bf16.msra.mxu0 0
    %1063 = vmatprep.subr.bf16.mxu0 0
    %1064 = vmatpush1.bf16.msra.mxu0 0
    %1065 = vmatprep.subr.bf16.mxu0 0
    %1066 = vmatpush1.bf16.msra.mxu0 0
    %1067 = vmatprep.subr.bf16.mxu0 0
    %1068 = vmatpush1.bf16.msra.mxu0 0
    %1069 = vmatprep.subr.bf16.mxu0 0
    %1070 = vmatpush1.bf16.msra.mxu0 0
    %1071 = vmatprep.subr.bf16.mxu0 0
    %1072 = vmatpush1.bf16.msra.mxu0 0
    %1073 = vmatprep.subr.bf16.mxu0 0
    %1074 = vmatpush1.bf16.msra.mxu0 0
    %1075 = vmatprep.mubr.bf16.mxu0 0
    %1076 = vmatmul.mubr.bf16.gmra.mrb[0].mxu0 %v1041
    %v1077 = vpop.f32.mrb[0].mxu0
    %v1078 = vadd.f32 %v1027, %v1077
    %v1079 = vpop.f32.mrb[0].mxu0
    %v1080 = vpop.f32.mrb[0].mxu0
    %v1081 = vpop.f32.mrb[0].mxu0
    %1082 = vdwg.mxu0
    %1083 = vst.msk [vmem:[#allocation2] sm:$0xff] %vm755, %v1078
    // Predicated region
    $region18: #{mlp_forward.1} parent=1 // pred_check
      _
    $region19: #{mlp_forward.1} parent=1 // pred_check_branch
      %1085 = sbr.rel (0) target = $region21
    $region20: #{mlp_forward.1} parent=1 // pred_region
      %s1087 = ssub.s32 128, 128
      %1088 = vsyncadd [#allocation3], %s1087
      %s1090 = sshll.u32 [#allocation2], 4
      %s1091 = int_to_ptr.vmem [resolvable:$true] %s1090
      %1093 = dma.vmem_to_hbm [thread:$0]  %s1091, 128, %s4, [#allocation3]
    $region21: #{mlp_forward.1} parent=1 // pred_fallthru
      _
    // Predicated region
    $region22: #{mlp_forward.1} parent=1 // pred_check
      _
    $region23: #{mlp_forward.1} parent=1 // pred_check_branch
      %1095 = sbr.rel (0) target = $region25
    $region24: #{mlp_forward.1} parent=1 // pred_region
      %1096 = dma.done [#allocation3], 128
    $region25: #{mlp_forward.1} parent=1 // pred_fallthru
      _
    %1097 = vsyncpa [#allocation3], 1

</llo_original>
